<compile_context>
chip_gen: v7x
topology: tpu7x:2x2x1
jax: 0.10.0
libtpu: 0.0.40
codegen_flags: <defaults>
</compile_context>

<pallas_src>
import jax
import jax.numpy as jnp
from jax.experimental import pallas as pl
from jax.experimental.pallas import tpu as pltpu


def _conv_se_kernel(p_ref, w_ref, b_ref, w1_ref, w2_ref, o_ref):
    """Fused conv3x3 (im2col matmul) + ReLU + SE + channel scale.

    p_ref : (Bt, HW, Kp)   im2col patches, K zero-padded to a multiple of 128
    w_ref : (Kp, Np)       conv weights as a matmul matrix (zero padded)
    b_ref : (1, Np)        conv bias (zero padded)
    w1_ref: (Np, Cr)       SE fc1 weight, transposed (padded rows are zero)
    w2_ref: (Cr, Np)       SE fc2 weight, transposed
    o_ref : (Bt, HW, Np)   SE-scaled conv output (channels >= Cout are zero)
    """
    Bt, HW, Kp = p_ref.shape
    Np = o_ref.shape[-1]
    M = Bt * HW

    # 3x3 conv as one big MXU matmul + bias + ReLU.
    patches = p_ref[...].reshape(M, Kp)            # merge leading dims only
    acc = jnp.dot(patches, w_ref[...], preferred_element_type=jnp.float32)
    acc = jnp.maximum(acc + b_ref[...], 0.0)       # (M, Np), first ReLU

    # SE global average pool per batch element, pushed to the MXU with a
    # block-diagonal ones selector: pooled[b, n] = sum_h acc[b*HW + h, n].
    row_id = jax.lax.broadcasted_iota(jnp.int32, (Bt, M), 0)
    col_id = jax.lax.broadcasted_iota(jnp.int32, (Bt, M), 1)
    lo = row_id * HW
    sel = jnp.logical_and(col_id >= lo, col_id < lo + HW).astype(jnp.float32)
    pooled = jnp.dot(sel, acc, preferred_element_type=jnp.float32)  # (Bt, Np)
    y = pooled * (1.0 / HW)

    h = jnp.maximum(
        jnp.dot(y, w1_ref[...], preferred_element_type=jnp.float32), 0.0)
    s = jax.nn.sigmoid(
        jnp.dot(h, w2_ref[...], preferred_element_type=jnp.float32))  # (Bt, Np)

    # Channel-wise scale. The module's trailing ReLU is a no-op here
    # (acc >= 0, sigmoid > 0) and is intentionally dropped.
    out = acc.reshape(Bt, HW, Np) * s[:, None, :]
    o_ref[...] = out.astype(o_ref.dtype)


def _round_up(x, m):
    return (x + m - 1) // m * m


def conv_after_residual_unit(x_nchw, conv_w, conv_b, fc1_w, fc2_w):
    """Forward pass matching ConvAfterResidualUnit.forward.

    x_nchw : (B, Cin, H, W)     float32
    conv_w : (Cout, Cin, 3, 3)  PyTorch Conv2d weight (OIHW)
    conv_b : (Cout,)
    fc1_w  : (Cout//8, Cout)    PyTorch Linear weight (out_feat, in_feat)
    fc2_w  : (Cout, Cout//8)
    returns: (B, Cout, H, W)
    """
    B, Cin, H, W = x_nchw.shape
    Cout = conv_w.shape[0]
    Cr = fc1_w.shape[0]
    HW = H * W
    K = 9 * Cin
    Kp = _round_up(K, 128)       # lane-dense, MXU-friendly contraction dim
    Np = _round_up(Cout, 128)    # lane-dense output channel dim

    # --- layout plumbing in the wrapper (XLA): lane-dense slabs for the kernel
    x_nhwc = jnp.transpose(x_nchw, (0, 2, 3, 1))                   # (B,H,W,Cin)
    xp = jnp.pad(x_nhwc, ((0, 0), (1, 1), (1, 1), (0, 0)))
    cols = [xp[:, kh:kh + H, kw:kw + W, :]
            for kh in range(3) for kw in range(3)]
    patches = jnp.concatenate(cols, axis=-1).reshape(B, HW, K)
    patches = jnp.pad(patches, ((0, 0), (0, 0), (0, Kp - K)))      # (B,HW,Kp)

    # conv_w OIHW -> rows ordered (kh, kw, cin), matching the im2col K order.
    w_mat = jnp.transpose(conv_w, (2, 3, 1, 0)).reshape(K, Cout)
    w_mat = jnp.pad(w_mat, ((0, Kp - K), (0, Np - Cout)))          # (Kp, Np)
    b_row = jnp.pad(conv_b, (0, Np - Cout)).reshape(1, Np)
    w1_p = jnp.pad(jnp.transpose(fc1_w), ((0, Np - Cout), (0, 0)))  # (Np, Cr)
    w2_p = jnp.pad(jnp.transpose(fc2_w), ((0, 0), (0, Np - Cout)))  # (Cr, Np)

    # --- pick batch elements per grid step: amortize per-step overhead while
    #     keeping double-buffered blocks comfortably inside VMEM.
    per_elem_bytes = HW * (Kp + Np) * 4
    budget = 8 * 1024 * 1024
    Bt = 1
    for cand in range(1, B + 1):
        if B % cand == 0 and cand * per_elem_bytes * 2 <= budget:
            Bt = cand
    grid = (B // Bt,)

    weight_bytes = (Kp * Np + Np + Np * Cr + Cr * Np) * 4
    vmem_need = 2 * Bt * per_elem_bytes + 2 * weight_bytes + (1 << 20)
    vmem_limit = int(min(max(vmem_need, 32 << 20), 64 << 20))

    out = pl.pallas_call(
        _conv_se_kernel,
        out_shape=jax.ShapeDtypeStruct((B, HW, Np), x_nchw.dtype),
        grid_spec=pltpu.PrefetchScalarGridSpec(
            num_scalar_prefetch=0,
            grid=grid,
            in_specs=[
                pl.BlockSpec((Bt, HW, Kp), lambda b: (b, 0, 0)),
                pl.BlockSpec((Kp, Np), lambda b: (0, 0)),
                pl.BlockSpec((1, Np), lambda b: (0, 0)),
                pl.BlockSpec((Np, Cr), lambda b: (0, 0)),
                pl.BlockSpec((Cr, Np), lambda b: (0, 0)),
            ],
            out_specs=pl.BlockSpec((Bt, HW, Np), lambda b: (b, 0, 0)),
        ),
        compiler_params=pltpu.CompilerParams(
            dimension_semantics=("parallel",),
            vmem_limit_bytes=vmem_limit),
    )(patches, w_mat, b_row, w1_p, w2_p)

    # Strip channel padding, back to NCHW to match the PyTorch module output.
    out = out[:, :, :Cout].reshape(B, H, W, Cout)
    return jnp.transpose(out, (0, 3, 1, 2))


def _reference(x_nchw, conv_w, conv_b, fc1_w, fc2_w):
    """Pure-JAX reference for correctness checking."""
    conv = jax.lax.conv_general_dilated(
        x_nchw, conv_w, window_strides=(1, 1), padding="SAME",
        dimension_numbers=("NCHW", "OIHW", "NCHW"))
    conv = jnp.maximum(conv + conv_b[None, :, None, None], 0.0)
    y = jnp.mean(conv, axis=(2, 3))                        # (B, C)
    y = jnp.maximum(y @ fc1_w.T, 0.0)
    y = jax.nn.sigmoid(y @ fc2_w.T)                        # (B, C)
    out = conv * y[:, :, None, None]
    return jnp.maximum(out, 0.0)


if __name__ == "__main__":
    B, Cin, Cout, H, W = 2, 4, 16, 16, 16
    Cr = Cout // 8

    key = jax.random.PRNGKey(0)
    kx, kw, kb, k1, k2 = jax.random.split(key, 5)
    x = jax.random.normal(kx, (B, Cin, H, W), dtype=jnp.float32)
    conv_w = jax.random.normal(kw, (Cout, Cin, 3, 3), dtype=jnp.float32) * 0.1
    conv_b = jax.random.normal(kb, (Cout,), dtype=jnp.float32) * 0.1
    fc1_w = jax.random.normal(k1, (Cr, Cout), dtype=jnp.float32) * 0.1
    fc2_w = jax.random.normal(k2, (Cout, Cr), dtype=jnp.float32) * 0.1

    out = conv_after_residual_unit(x, conv_w, conv_b, fc1_w, fc2_w)
    out = jax.block_until_ready(out)

    ref = _reference(x, conv_w, conv_b, fc1_w, fc2_w)
    assert out.shape == (B, Cout, H, W)
    assert jnp.allclose(out, ref, atol=1e-4, rtol=1e-4)

    print("KERNEL_OK")
</pallas_src>

<mosaic_0001>
module attributes {stable_mosaic.version = 11 : i64} {
  func.func @_conv_se_kernel(%arg0: i32, %arg1: memref<2x256x128xf32, #tpu.memory_space<vmem>>, %arg2: memref<128x128xf32, #tpu.memory_space<vmem>>, %arg3: memref<1x128xf32, #tpu.memory_space<vmem>>, %arg4: memref<128x2xf32, #tpu.memory_space<vmem>>, %arg5: memref<2x128xf32, #tpu.memory_space<vmem>>, %arg6: memref<2x256x128xf32, #tpu.memory_space<vmem>>) attributes {dimension_semantics = [#tpu.dimension_semantics<parallel>], iteration_bounds = array<i64: 1>, scalar_prefetch = 0 : i64, scratch_operands = 0 : i64, tpu.core_type = #tpu.core_type<tc>, window_params = [{transform_indices = @transform_0, window_bounds = array<i64: 2, 256, 128>}, {pipeline_mode = #tpu.pipeline_mode<synchronous>, transform_indices = @transform_1, window_bounds = array<i64: 128, 128>}, {pipeline_mode = #tpu.pipeline_mode<synchronous>, transform_indices = @transform_2, window_bounds = array<i64: 1, 128>}, {pipeline_mode = #tpu.pipeline_mode<synchronous>, transform_indices = @transform_3, window_bounds = array<i64: 128, 2>}, {pipeline_mode = #tpu.pipeline_mode<synchronous>, transform_indices = @transform_4, window_bounds = array<i64: 2, 128>}, {transform_indices = @transform_5, window_bounds = array<i64: 2, 256, 128>}]} {
    %c0 = arith.constant 0 : index
    %c0_0 = arith.constant 0 : index
    %c0_1 = arith.constant 0 : index
    %0 = vector.load %arg1[%c0, %c0_0, %c0_1] : memref<2x256x128xf32, #tpu.memory_space<vmem>>, vector<2x256x128xf32>
    %1 = vector.shape_cast %0 : vector<2x256x128xf32> to vector<512x128xf32>
    %c0_2 = arith.constant 0 : index
    %c0_3 = arith.constant 0 : index
    %2 = vector.load %arg2[%c0_2, %c0_3] : memref<128x128xf32, #tpu.memory_space<vmem>>, vector<128x128xf32>
    %cst = arith.constant dense<0.000000e+00> : vector<512x128xf32>
    %3 = tpu.matmul %1, %2, %cst {dimension_numbers = #tpu.dot_dimension_numbers<[1], [0], [0], [1], [0, 0, 1, 1], [], []>} : vector<512x128xf32>, vector<128x128xf32>, vector<512x128xf32> -> vector<512x128xf32>
    %c0_4 = arith.constant 0 : index
    %c0_5 = arith.constant 0 : index
    %4 = vector.load %arg3[%c0_4, %c0_5] : memref<1x128xf32, #tpu.memory_space<vmem>>, vector<1x128xf32>
    %5 = vector.broadcast %4 : vector<1x128xf32> to vector<512x128xf32>
    %6 = arith.addf %3, %5 : vector<512x128xf32>
    %cst_6 = arith.constant 0.000000e+00 : f32
    %7 = vector.broadcast %cst_6 : f32 to vector<512x128xf32>
    %8 = arith.maximumf %6, %7 : vector<512x128xf32>
    %9 = tpu.iota {dimensions = array<i32: 0>} : vector<2x512xi32>
    %10 = tpu.iota {dimensions = array<i32: 1>} : vector<2x512xi32>
    %c256_i32 = arith.constant 256 : i32
    %11 = vector.broadcast %c256_i32 : i32 to vector<2x512xi32>
    %12 = arith.muli %9, %11 : vector<2x512xi32>
    %13 = arith.cmpi sge, %10, %12 : vector<2x512xi32>
    %c256_i32_7 = arith.constant 256 : i32
    %14 = vector.broadcast %c256_i32_7 : i32 to vector<2x512xi32>
    %15 = arith.addi %12, %14 : vector<2x512xi32>
    %16 = arith.cmpi slt, %10, %15 : vector<2x512xi32>
    %17 = arith.andi %13, %16 : vector<2x512xi1>
    %18 = arith.extui %17 : vector<2x512xi1> to vector<2x512xi32>
    %19 = arith.sitofp %18 : vector<2x512xi32> to vector<2x512xf32>
    %cst_8 = arith.constant dense<0.000000e+00> : vector<2x128xf32>
    %20 = tpu.matmul %19, %8, %cst_8 {dimension_numbers = #tpu.dot_dimension_numbers<[1], [0], [0], [1], [0, 0, 1, 1], [], []>} : vector<2x512xf32>, vector<512x128xf32>, vector<2x128xf32> -> vector<2x128xf32>
    %cst_9 = arith.constant 3.906250e-03 : f32
    %21 = vector.broadcast %cst_9 : f32 to vector<2x128xf32>
    %22 = arith.mulf %20, %21 : vector<2x128xf32>
    %c0_10 = arith.constant 0 : index
    %c0_11 = arith.constant 0 : index
    %23 = vector.load %arg4[%c0_10, %c0_11] : memref<128x2xf32, #tpu.memory_space<vmem>>, vector<128x2xf32>
    %cst_12 = arith.constant dense<0.000000e+00> : vector<2x2xf32>
    %24 = tpu.matmul %22, %23, %cst_12 {dimension_numbers = #tpu.dot_dimension_numbers<[1], [0], [0], [1], [0, 0, 1, 1], [], []>} : vector<2x128xf32>, vector<128x2xf32>, vector<2x2xf32> -> vector<2x2xf32>
    %cst_13 = arith.constant 0.000000e+00 : f32
    %25 = vector.broadcast %cst_13 : f32 to vector<2x2xf32>
    %26 = arith.maximumf %24, %25 : vector<2x2xf32>
    %c0_14 = arith.constant 0 : index
    %c0_15 = arith.constant 0 : index
    %27 = vector.load %arg5[%c0_14, %c0_15] : memref<2x128xf32, #tpu.memory_space<vmem>>, vector<2x128xf32>
    %cst_16 = arith.constant dense<0.000000e+00> : vector<2x128xf32>
    %28 = tpu.matmul %26, %27, %cst_16 {dimension_numbers = #tpu.dot_dimension_numbers<[1], [0], [0], [1], [0, 0, 1, 1], [], []>} : vector<2x2xf32>, vector<2x128xf32>, vector<2x128xf32> -> vector<2x128xf32>
    %29 = arith.negf %28 : vector<2x128xf32>
    %30 = math.exp %29 : vector<2x128xf32>
    %cst_17 = arith.constant 1.000000e+00 : f32
    %31 = vector.broadcast %cst_17 : f32 to vector<2x128xf32>
    %32 = arith.addf %31, %30 : vector<2x128xf32>
    %33 = arith.divf %31, %32 : vector<2x128xf32>
    %34 = vector.shape_cast %8 : vector<512x128xf32> to vector<2x256x128xf32>
    %35 = vector.shape_cast %33 : vector<2x128xf32> to vector<2x1x128xf32>
    %36 = vector.broadcast %35 : vector<2x1x128xf32> to vector<2x256x128xf32>
    %37 = arith.mulf %34, %36 : vector<2x256x128xf32>
    %c0_18 = arith.constant 0 : index
    %c0_19 = arith.constant 0 : index
    %c0_20 = arith.constant 0 : index
    %38 = vector.load %arg6[%c0_18, %c0_19, %c0_20] : memref<2x256x128xf32, #tpu.memory_space<vmem>>, vector<2x256x128xf32>
    tpu.vector_store %arg6[%c0_18, %c0_19, %c0_20], %37 {strides = array<i32>} : memref<2x256x128xf32, #tpu.memory_space<vmem>>, vector<2x256x128xf32>,
    return
  }
  func.func @transform_0(%arg0: i32) -> (i32, i32, i32) {
    %c0_i32 = arith.constant 0 : i32
    %c0_i32_0 = arith.constant 0 : i32
    %c0_i32_1 = arith.constant 0 : i32
    return %arg0, %c0_i32, %c0_i32_0 : i32, i32, i32
  }
  func.func @transform_1(%arg0: i32) -> (i32, i32) {
    %c0_i32 = arith.constant 0 : i32
    %c0_i32_0 = arith.constant 0 : i32
    %c0_i32_1 = arith.constant 0 : i32
    return %c0_i32, %c0_i32_0 : i32, i32
  }
  func.func @transform_2(%arg0: i32) -> (i32, i32) {
    %c0_i32 = arith.constant 0 : i32
    %c0_i32_0 = arith.constant 0 : i32
    %c0_i32_1 = arith.constant 0 : i32
    return %c0_i32, %c0_i32_0 : i32, i32
  }
  func.func @transform_3(%arg0: i32) -> (i32, i32) {
    %c0_i32 = arith.constant 0 : i32
    %c0_i32_0 = arith.constant 0 : i32
    %c0_i32_1 = arith.constant 0 : i32
    return %c0_i32, %c0_i32_0 : i32, i32
  }
  func.func @transform_4(%arg0: i32) -> (i32, i32) {
    %c0_i32 = arith.constant 0 : i32
    %c0_i32_0 = arith.constant 0 : i32
    %c0_i32_1 = arith.constant 0 : i32
    return %c0_i32, %c0_i32_0 : i32, i32
  }
  func.func @transform_5(%arg0: i32) -> (i32, i32, i32) {
    %c0_i32 = arith.constant 0 : i32
    %c0_i32_0 = arith.constant 0 : i32
    %c0_i32_1 = arith.constant 0 : i32
    return %arg0, %c0_i32, %c0_i32_0 : i32, i32, i32
  }
}

</mosaic_0001>

<llo_original>
// kernel: tpu_custom_call.1
$region0: #{tpu_custom_call.1}
  #allocation0 [shape = 'u32[]', space=smem, size = 0x4, offset = 0x4, fixed_abs, tag = 'smem constant byte address 0x4 - core index']
  #allocation1 [shape = 'u32[144,128]{1,0:T(1,128)}', space=vmem, size = 0x12000, scoped, tag = 'internal scratch']
  %s0 = inlined_call_operand.hbm [shape: f32[2,256,128], index: 0, kind: input, shape index: {}]
  %s1 = inlined_call_operand.vmem [shape: f32[128,128], index: 1, kind: input, shape index: {}]
  %s2 = inlined_call_operand.vmem [shape: f32[1,128], index: 2, kind: input, shape index: {}]
  %s3 = inlined_call_operand.vmem [shape: f32[128,2], index: 3, kind: input, shape index: {}]
  %s4 = inlined_call_operand.vmem [shape: f32[2,128], index: 4, kind: input, shape index: {}]
  %s5 = inlined_call_operand.hbm [shape: f32[2,256,128], index: 5, kind: output, shape index: {}]
  %s6 = sld [smem:[#allocation0]]
  $region34: #{tpu_custom_call.1} parent=0
    _
  %s8 = ssub.s32 1, %s6
  %s9 = scalar_select 0, %s8, %s6
  $region1: #{tpu_custom_call.1} parent=0
    #allocation2 [shape = 'u8[262144]{0}', space=vmem, size = 0x40000, scoped, tag = 'input window, operand 0, single buffered']
    #allocation3 [shape = 's32[1]{0}', space=sflag, size = 0x4, scoped, tag = 'scoped memory for tpu_custom_call.1']
    #allocation4 [shape = 's32[1]{0}', space=sflag, size = 0x4, scoped, tag = 'scoped memory for tpu_custom_call.1']
    #allocation5 [shape = 'u8[262144]{0}', space=vmem, size = 0x40000, scoped, tag = 'output window, operand 0, single buffered']
    %10 = vsyncpa [#allocation3], 0
    %11 = vsyncpa [#allocation4], 0
    // Predicated region
    $region2: #{tpu_custom_call.1} parent=1 // pred_check
      _
    $region3: #{tpu_custom_call.1} parent=1 // pred_check_branch
      %13 = sbr.rel (0) target = $region5
    $region4: #{tpu_custom_call.1} parent=1 // pred_region
      %s15 = ssub.s32 8192, 8192
      %16 = vsyncadd [#allocation3], %s15
      %s17 = sshll.u32 [#allocation2], 4
      %s18 = int_to_ptr.vmem [resolvable:$true] %s17
      %23 = dma.hbm_to_vmem [thread:$0]  %s0, 8192, %s18, [#allocation3], 128, 128, 8
    $region5: #{tpu_custom_call.1} parent=1 // pred_fallthru
      _
    // Predicated region
    $region6: #{tpu_custom_call.1} parent=1 // pred_check
      _
    $region7: #{tpu_custom_call.1} parent=1 // pred_check_branch
      %25 = sbr.rel (0) target = $region9
    $region8: #{tpu_custom_call.1} parent=1 // pred_region
      _
    $region9: #{tpu_custom_call.1} parent=1 // pred_fallthru
      _
    // Predicated region
    $region10: #{tpu_custom_call.1} parent=1 // pred_check
      _
    $region11: #{tpu_custom_call.1} parent=1 // pred_check_branch
      %27 = sbr.rel (0) target = $region13
    $region12: #{tpu_custom_call.1} parent=1 // pred_region
      _
    $region13: #{tpu_custom_call.1} parent=1 // pred_fallthru
      _
    // Predicated region
    $region14: #{tpu_custom_call.1} parent=1 // pred_check
      _
    $region15: #{tpu_custom_call.1} parent=1 // pred_check_branch
      %29 = sbr.rel (0) target = $region17
    $region16: #{tpu_custom_call.1} parent=1 // pred_region
      _
    $region17: #{tpu_custom_call.1} parent=1 // pred_fallthru
      _
    // Predicated region
    $region18: #{tpu_custom_call.1} parent=1 // pred_check
      _
    $region19: #{tpu_custom_call.1} parent=1 // pred_check_branch
      %31 = sbr.rel (0) target = $region21
    $region20: #{tpu_custom_call.1} parent=1 // pred_region
      _
    $region21: #{tpu_custom_call.1} parent=1 // pred_fallthru
      _
    // Predicated region
    $region22: #{tpu_custom_call.1} parent=1 // pred_check
      _
    $region23: #{tpu_custom_call.1} parent=1 // pred_check_branch
      %33 = sbr.rel (0) target = $region25
    $region24: #{tpu_custom_call.1} parent=1 // pred_region
      %34 = dma.done [#allocation3], 8192
    $region25: #{tpu_custom_call.1} parent=1 // pred_fallthru
      _
    %v35 = vld [vmem:[#allocation2] sm:$0xff]
    %v36 = vld [vmem:[#allocation2 + $0x8] sm:$0xff]
    %v37 = vld [vmem:[#allocation2 + $0x10] sm:$0xff]
    %v38 = vld [vmem:[#allocation2 + $0x18] sm:$0xff]
    %v39 = vld [vmem:[#allocation2 + $0x20] sm:$0xff]
    %v40 = vld [vmem:[#allocation2 + $0x28] sm:$0xff]
    %v41 = vld [vmem:[#allocation2 + $0x30] sm:$0xff]
    %v42 = vld [vmem:[#allocation2 + $0x38] sm:$0xff]
    %v43 = vld [vmem:[#allocation2 + $0x40] sm:$0xff]
    %v44 = vld [vmem:[#allocation2 + $0x48] sm:$0xff]
    %v45 = vld [vmem:[#allocation2 + $0x50] sm:$0xff]
    %v46 = vld [vmem:[#allocation2 + $0x58] sm:$0xff]
    %v47 = vld [vmem:[#allocation2 + $0x60] sm:$0xff]
    %v48 = vld [vmem:[#allocation2 + $0x68] sm:$0xff]
    %v49 = vld [vmem:[#allocation2 + $0x70] sm:$0xff]
    %v50 = vld [vmem:[#allocation2 + $0x78] sm:$0xff]
    %v51 = vld [vmem:[#allocation2 + $0x80] sm:$0xff]
    %v52 = vld [vmem:[#allocation2 + $0x88] sm:$0xff]
    %v53 = vld [vmem:[#allocation2 + $0x90] sm:$0xff]
    %v54 = vld [vmem:[#allocation2 + $0x98] sm:$0xff]
    %v55 = vld [vmem:[#allocation2 + $0xa0] sm:$0xff]
    %v56 = vld [vmem:[#allocation2 + $0xa8] sm:$0xff]
    %v57 = vld [vmem:[#allocation2 + $0xb0] sm:$0xff]
    %v58 = vld [vmem:[#allocation2 + $0xb8] sm:$0xff]
    %v59 = vld [vmem:[#allocation2 + $0xc0] sm:$0xff]
    %v60 = vld [vmem:[#allocation2 + $0xc8] sm:$0xff]
    %v61 = vld [vmem:[#allocation2 + $0xd0] sm:$0xff]
    %v62 = vld [vmem:[#allocation2 + $0xd8] sm:$0xff]
    %v63 = vld [vmem:[#allocation2 + $0xe0] sm:$0xff]
    %v64 = vld [vmem:[#allocation2 + $0xe8] sm:$0xff]
    %v65 = vld [vmem:[#allocation2 + $0xf0] sm:$0xff]
    %v66 = vld [vmem:[#allocation2 + $0xf8] sm:$0xff]
    %v67 = vld [vmem:[#allocation2 + $0x100] sm:$0xff]
    %v68 = vld [vmem:[#allocation2 + $0x108] sm:$0xff]
    %v69 = vld [vmem:[#allocation2 + $0x110] sm:$0xff]
    %v70 = vld [vmem:[#allocation2 + $0x118] sm:$0xff]
    %v71 = vld [vmem:[#allocation2 + $0x120] sm:$0xff]
    %v72 = vld [vmem:[#allocation2 + $0x128] sm:$0xff]
    %v73 = vld [vmem:[#allocation2 + $0x130] sm:$0xff]
    %v74 = vld [vmem:[#allocation2 + $0x138] sm:$0xff]
    %v75 = vld [vmem:[#allocation2 + $0x140] sm:$0xff]
    %v76 = vld [vmem:[#allocation2 + $0x148] sm:$0xff]
    %v77 = vld [vmem:[#allocation2 + $0x150] sm:$0xff]
    %v78 = vld [vmem:[#allocation2 + $0x158] sm:$0xff]
    %v79 = vld [vmem:[#allocation2 + $0x160] sm:$0xff]
    %v80 = vld [vmem:[#allocation2 + $0x168] sm:$0xff]
    %v81 = vld [vmem:[#allocation2 + $0x170] sm:$0xff]
    %v82 = vld [vmem:[#allocation2 + $0x178] sm:$0xff]
    %v83 = vld [vmem:[#allocation2 + $0x180] sm:$0xff]
    %v84 = vld [vmem:[#allocation2 + $0x188] sm:$0xff]
    %v85 = vld [vmem:[#allocation2 + $0x190] sm:$0xff]
    %v86 = vld [vmem:[#allocation2 + $0x198] sm:$0xff]
    %v87 = vld [vmem:[#allocation2 + $0x1a0] sm:$0xff]
    %v88 = vld [vmem:[#allocation2 + $0x1a8] sm:$0xff]
    %v89 = vld [vmem:[#allocation2 + $0x1b0] sm:$0xff]
    %v90 = vld [vmem:[#allocation2 + $0x1b8] sm:$0xff]
    %v91 = vld [vmem:[#allocation2 + $0x1c0] sm:$0xff]
    %v92 = vld [vmem:[#allocation2 + $0x1c8] sm:$0xff]
    %v93 = vld [vmem:[#allocation2 + $0x1d0] sm:$0xff]
    %v94 = vld [vmem:[#allocation2 + $0x1d8] sm:$0xff]
    %v95 = vld [vmem:[#allocation2 + $0x1e0] sm:$0xff]
    %v96 = vld [vmem:[#allocation2 + $0x1e8] sm:$0xff]
    %v97 = vld [vmem:[#allocation2 + $0x1f0] sm:$0xff]
    %v98 = vld [vmem:[#allocation2 + $0x1f8] sm:$0xff]
    %v99 = vld [vmem:[%s1] sm:$0xff]
    %v100 = vld [vmem:[%s1 + $0x8] sm:$0xff]
    %v101 = vld [vmem:[%s1 + $0x10] sm:$0xff]
    %v102 = vld [vmem:[%s1 + $0x18] sm:$0xff]
    %v103 = vld [vmem:[%s1 + $0x20] sm:$0xff]
    %v104 = vld [vmem:[%s1 + $0x28] sm:$0xff]
    %v105 = vld [vmem:[%s1 + $0x30] sm:$0xff]
    %v106 = vld [vmem:[%s1 + $0x38] sm:$0xff]
    %v107 = vld [vmem:[%s1 + $0x40] sm:$0xff]
    %v108 = vld [vmem:[%s1 + $0x48] sm:$0xff]
    %v109 = vld [vmem:[%s1 + $0x50] sm:$0xff]
    %v110 = vld [vmem:[%s1 + $0x58] sm:$0xff]
    %v111 = vld [vmem:[%s1 + $0x60] sm:$0xff]
    %v112 = vld [vmem:[%s1 + $0x68] sm:$0xff]
    %v113 = vld [vmem:[%s1 + $0x70] sm:$0xff]
    %v114 = vld [vmem:[%s1 + $0x78] sm:$0xff]
    %v115 = vld [vmem:[%s2] sm:$0x1]
    %v117 = vlaneseq
    %v118 = vshrl.u32 %v117, 7
    %v119 = vsub.s32 0, %v118
    %v120 = vrot.slane %v115, %v119
    %122 = vmatprep.subr.mxu0 0.0
    %123 = vmatpush1.msra.mxu0 %v99
    %124 = vmatprep.subr.mxu0 0.0
    %125 = vmatpush1.msra.mxu0 %v100
    %126 = vmatprep.subr.mxu0 0.0
    %127 = vmatpush1.msra.mxu0 %v101
    %128 = vmatprep.subr.mxu0 0.0
    %129 = vmatpush1.msra.mxu0 %v102
    %130 = vmatprep.subr.mxu0 0.0
    %131 = vmatpush1.msra.mxu0 %v103
    %132 = vmatprep.subr.mxu0 0.0
    %133 = vmatpush1.msra.mxu0 %v104
    %134 = vmatprep.subr.mxu0 0.0
    %135 = vmatpush1.msra.mxu0 %v105
    %136 = vmatprep.subr.mxu0 0.0
    %137 = vmatpush1.msra.mxu0 %v106
    %138 = vmatprep.subr.mxu0 0.0
    %139 = vmatpush1.msra.mxu0 %v107
    %140 = vmatprep.subr.mxu0 0.0
    %141 = vmatpush1.msra.mxu0 %v108
    %142 = vmatprep.subr.mxu0 0.0
    %143 = vmatpush1.msra.mxu0 %v109
    %144 = vmatprep.subr.mxu0 0.0
    %145 = vmatpush1.msra.mxu0 %v110
    %146 = vmatprep.subr.mxu0 0.0
    %147 = vmatpush1.msra.mxu0 %v111
    %148 = vmatprep.subr.mxu0 0.0
    %149 = vmatpush1.msra.mxu0 %v112
    %150 = vmatprep.subr.mxu0 0.0
    %151 = vmatpush1.msra.mxu0 %v113
    %152 = vmatprep.subr.mxu0 0.0
    %153 = vmatpush1.msra.mxu0 %v114
    %154 = vmatprep.subr.mxu0 0.0
    %155 = vmatpush1.msra.mxu0 0.0
    %156 = vmatprep.subr.mxu0 0.0
    %157 = vmatpush1.msra.mxu0 0.0
    %158 = vmatprep.subr.mxu0 0.0
    %159 = vmatpush1.msra.mxu0 0.0
    %160 = vmatprep.subr.mxu0 0.0
    %161 = vmatpush1.msra.mxu0 0.0
    %162 = vmatprep.subr.mxu0 0.0
    %163 = vmatpush1.msra.mxu0 0.0
    %164 = vmatprep.subr.mxu0 0.0
    %165 = vmatpush1.msra.mxu0 0.0
    %166 = vmatprep.subr.mxu0 0.0
    %167 = vmatpush1.msra.mxu0 0.0
    %168 = vmatprep.subr.mxu0 0.0
    %169 = vmatpush1.msra.mxu0 0.0
    %170 = vmatprep.subr.mxu0 0.0
    %171 = vmatpush1.msra.mxu0 0.0
    %172 = vmatprep.subr.mxu0 0.0
    %173 = vmatpush1.msra.mxu0 0.0
    %174 = vmatprep.subr.mxu0 0.0
    %175 = vmatpush1.msra.mxu0 0.0
    %176 = vmatprep.subr.mxu0 0.0
    %177 = vmatpush1.msra.mxu0 0.0
    %178 = vmatprep.subr.mxu0 0.0
    %179 = vmatpush1.msra.mxu0 0.0
    %180 = vmatprep.subr.mxu0 0.0
    %181 = vmatpush1.msra.mxu0 0.0
    %182 = vmatprep.subr.mxu0 0.0
    %183 = vmatpush1.msra.mxu0 0.0
    %184 = vmatprep.subr.mxu0 0.0
    %185 = vmatpush1.msra.mxu0 0.0
    %186 = vmatprep.mubr.f32.mxu0 0.0
    %187 = vmatmul.mubr.f32.gmra.mrb[0].mxu0 %v35
    %v188 = vpop.f32.mrb[0].mxu0
    %v189 = vadd.f32 %v120, %v188
    %v190 = vpop.f32.mrb[0].mxu0
    %191 = vmatprep.mubr.f32.mxu0 0.0
    %192 = vmatmul.mubr.f32.gmra.mrb[0].mxu0 %v36
    %v193 = vpop.f32.mrb[0].mxu0
    %v194 = vadd.f32 %v120, %v193
    %v195 = vpop.f32.mrb[0].mxu0
    %196 = vmatprep.mubr.f32.mxu0 0.0
    %197 = vmatmul.mubr.f32.gmra.mrb[0].mxu0 %v37
    %v198 = vpop.f32.mrb[0].mxu0
    %v199 = vadd.f32 %v120, %v198
    %v200 = vpop.f32.mrb[0].mxu0
    %201 = vmatprep.mubr.f32.mxu0 0.0
    %202 = vmatmul.mubr.f32.gmra.mrb[0].mxu0 %v38
    %v203 = vpop.f32.mrb[0].mxu0
    %v204 = vadd.f32 %v120, %v203
    %v205 = vpop.f32.mrb[0].mxu0
    %206 = vmatprep.mubr.f32.mxu0 0.0
    %207 = vmatmul.mubr.f32.gmra.mrb[0].mxu0 %v39
    %v208 = vpop.f32.mrb[0].mxu0
    %v209 = vadd.f32 %v120, %v208
    %v210 = vpop.f32.mrb[0].mxu0
    %211 = vmatprep.mubr.f32.mxu0 0.0
    %212 = vmatmul.mubr.f32.gmra.mrb[0].mxu0 %v40
    %v213 = vpop.f32.mrb[0].mxu0
    %v214 = vadd.f32 %v120, %v213
    %v215 = vpop.f32.mrb[0].mxu0
    %216 = vmatprep.mubr.f32.mxu0 0.0
    %217 = vmatmul.mubr.f32.gmra.mrb[0].mxu0 %v41
    %v218 = vpop.f32.mrb[0].mxu0
    %v219 = vadd.f32 %v120, %v218
    %v220 = vpop.f32.mrb[0].mxu0
    %221 = vmatprep.mubr.f32.mxu0 0.0
    %222 = vmatmul.mubr.f32.gmra.mrb[0].mxu0 %v42
    %v223 = vpop.f32.mrb[0].mxu0
    %v224 = vadd.f32 %v120, %v223
    %v225 = vpop.f32.mrb[0].mxu0
    %226 = vmatprep.mubr.f32.mxu0 0.0
    %227 = vmatmul.mubr.f32.gmra.mrb[0].mxu0 %v43
    %v228 = vpop.f32.mrb[0].mxu0
    %v229 = vadd.f32 %v120, %v228
    %v230 = vpop.f32.mrb[0].mxu0
    %231 = vmatprep.mubr.f32.mxu0 0.0
    %232 = vmatmul.mubr.f32.gmra.mrb[0].mxu0 %v44
    %v233 = vpop.f32.mrb[0].mxu0
    %v234 = vadd.f32 %v120, %v233
    %v235 = vpop.f32.mrb[0].mxu0
    %236 = vmatprep.mubr.f32.mxu0 0.0
    %237 = vmatmul.mubr.f32.gmra.mrb[0].mxu0 %v45
    %v238 = vpop.f32.mrb[0].mxu0
    %v239 = vadd.f32 %v120, %v238
    %v240 = vpop.f32.mrb[0].mxu0
    %241 = vmatprep.mubr.f32.mxu0 0.0
    %242 = vmatmul.mubr.f32.gmra.mrb[0].mxu0 %v46
    %v243 = vpop.f32.mrb[0].mxu0
    %v244 = vadd.f32 %v120, %v243
    %v245 = vpop.f32.mrb[0].mxu0
    %246 = vmatprep.mubr.f32.mxu0 0.0
    %247 = vmatmul.mubr.f32.gmra.mrb[0].mxu0 %v47
    %v248 = vpop.f32.mrb[0].mxu0
    %v249 = vadd.f32 %v120, %v248
    %v250 = vpop.f32.mrb[0].mxu0
    %251 = vmatprep.mubr.f32.mxu0 0.0
    %252 = vmatmul.mubr.f32.gmra.mrb[0].mxu0 %v48
    %v253 = vpop.f32.mrb[0].mxu0
    %v254 = vadd.f32 %v120, %v253
    %v255 = vpop.f32.mrb[0].mxu0
    %256 = vmatprep.mubr.f32.mxu0 0.0
    %257 = vmatmul.mubr.f32.gmra.mrb[0].mxu0 %v49
    %v258 = vpop.f32.mrb[0].mxu0
    %v259 = vadd.f32 %v120, %v258
    %v260 = vpop.f32.mrb[0].mxu0
    %261 = vmatprep.mubr.f32.mxu0 0.0
    %262 = vmatmul.mubr.f32.gmra.mrb[0].mxu0 %v50
    %v263 = vpop.f32.mrb[0].mxu0
    %v264 = vadd.f32 %v120, %v263
    %v265 = vpop.f32.mrb[0].mxu0
    %266 = vmatprep.mubr.f32.mxu0 0.0
    %267 = vmatmul.mubr.f32.gmra.mrb[0].mxu0 %v51
    %v268 = vpop.f32.mrb[0].mxu0
    %v269 = vadd.f32 %v120, %v268
    %v270 = vpop.f32.mrb[0].mxu0
    %271 = vmatprep.mubr.f32.mxu0 0.0
    %272 = vmatmul.mubr.f32.gmra.mrb[0].mxu0 %v52
    %v273 = vpop.f32.mrb[0].mxu0
    %v274 = vadd.f32 %v120, %v273
    %v275 = vpop.f32.mrb[0].mxu0
    %276 = vmatprep.mubr.f32.mxu0 0.0
    %277 = vmatmul.mubr.f32.gmra.mrb[0].mxu0 %v53
    %v278 = vpop.f32.mrb[0].mxu0
    %v279 = vadd.f32 %v120, %v278
    %v280 = vpop.f32.mrb[0].mxu0
    %281 = vmatprep.mubr.f32.mxu0 0.0
    %282 = vmatmul.mubr.f32.gmra.mrb[0].mxu0 %v54
    %v283 = vpop.f32.mrb[0].mxu0
    %v284 = vadd.f32 %v120, %v283
    %v285 = vpop.f32.mrb[0].mxu0
    %286 = vmatprep.mubr.f32.mxu0 0.0
    %287 = vmatmul.mubr.f32.gmra.mrb[0].mxu0 %v55
    %v288 = vpop.f32.mrb[0].mxu0
    %v289 = vadd.f32 %v120, %v288
    %v290 = vpop.f32.mrb[0].mxu0
    %291 = vmatprep.mubr.f32.mxu0 0.0
    %292 = vmatmul.mubr.f32.gmra.mrb[0].mxu0 %v56
    %v293 = vpop.f32.mrb[0].mxu0
    %v294 = vadd.f32 %v120, %v293
    %v295 = vpop.f32.mrb[0].mxu0
    %296 = vmatprep.mubr.f32.mxu0 0.0
    %297 = vmatmul.mubr.f32.gmra.mrb[0].mxu0 %v57
    %v298 = vpop.f32.mrb[0].mxu0
    %v299 = vadd.f32 %v120, %v298
    %v300 = vpop.f32.mrb[0].mxu0
    %301 = vmatprep.mubr.f32.mxu0 0.0
    %302 = vmatmul.mubr.f32.gmra.mrb[0].mxu0 %v58
    %v303 = vpop.f32.mrb[0].mxu0
    %v304 = vadd.f32 %v120, %v303
    %v305 = vpop.f32.mrb[0].mxu0
    %306 = vmatprep.mubr.f32.mxu0 0.0
    %307 = vmatmul.mubr.f32.gmra.mrb[0].mxu0 %v59
    %v308 = vpop.f32.mrb[0].mxu0
    %v309 = vadd.f32 %v120, %v308
    %v310 = vpop.f32.mrb[0].mxu0
    %311 = vmatprep.mubr.f32.mxu0 0.0
    %312 = vmatmul.mubr.f32.gmra.mrb[0].mxu0 %v60
    %v313 = vpop.f32.mrb[0].mxu0
    %v314 = vadd.f32 %v120, %v313
    %v315 = vpop.f32.mrb[0].mxu0
    %316 = vmatprep.mubr.f32.mxu0 0.0
    %317 = vmatmul.mubr.f32.gmra.mrb[0].mxu0 %v61
    %v318 = vpop.f32.mrb[0].mxu0
    %v319 = vadd.f32 %v120, %v318
    %v320 = vpop.f32.mrb[0].mxu0
    %321 = vmatprep.mubr.f32.mxu0 0.0
    %322 = vmatmul.mubr.f32.gmra.mrb[0].mxu0 %v62
    %v323 = vpop.f32.mrb[0].mxu0
    %v324 = vadd.f32 %v120, %v323
    %v325 = vpop.f32.mrb[0].mxu0
    %326 = vmatprep.mubr.f32.mxu0 0.0
    %327 = vmatmul.mubr.f32.gmra.mrb[0].mxu0 %v63
    %v328 = vpop.f32.mrb[0].mxu0
    %v329 = vadd.f32 %v120, %v328
    %v330 = vpop.f32.mrb[0].mxu0
    %331 = vmatprep.mubr.f32.mxu0 0.0
    %332 = vmatmul.mubr.f32.gmra.mrb[0].mxu0 %v64
    %v333 = vpop.f32.mrb[0].mxu0
    %v334 = vadd.f32 %v120, %v333
    %v335 = vpop.f32.mrb[0].mxu0
    %336 = vmatprep.mubr.f32.mxu0 0.0
    %337 = vmatmul.mubr.f32.gmra.mrb[0].mxu0 %v65
    %v338 = vpop.f32.mrb[0].mxu0
    %v339 = vadd.f32 %v120, %v338
    %v340 = vpop.f32.mrb[0].mxu0
    %341 = vmatprep.mubr.f32.mxu0 0.0
    %342 = vmatmul.mubr.f32.gmra.mrb[0].mxu0 %v66
    %v343 = vpop.f32.mrb[0].mxu0
    %v344 = vadd.f32 %v120, %v343
    %v345 = vpop.f32.mrb[0].mxu0
    %346 = vmatprep.mubr.f32.mxu0 0.0
    %347 = vmatmul.mubr.f32.gmra.mrb[0].mxu0 %v67
    %v348 = vpop.f32.mrb[0].mxu0
    %v349 = vadd.f32 %v120, %v348
    %v350 = vpop.f32.mrb[0].mxu0
    %351 = vmatprep.mubr.f32.mxu0 0.0
    %352 = vmatmul.mubr.f32.gmra.mrb[0].mxu0 %v68
    %v353 = vpop.f32.mrb[0].mxu0
    %v354 = vadd.f32 %v120, %v353
    %v355 = vpop.f32.mrb[0].mxu0
    %356 = vmatprep.mubr.f32.mxu0 0.0
    %357 = vmatmul.mubr.f32.gmra.mrb[0].mxu0 %v69
    %v358 = vpop.f32.mrb[0].mxu0
    %v359 = vadd.f32 %v120, %v358
    %v360 = vpop.f32.mrb[0].mxu0
    %361 = vmatprep.mubr.f32.mxu0 0.0
    %362 = vmatmul.mubr.f32.gmra.mrb[0].mxu0 %v70
    %v363 = vpop.f32.mrb[0].mxu0
    %v364 = vadd.f32 %v120, %v363
    %v365 = vpop.f32.mrb[0].mxu0
    %366 = vmatprep.mubr.f32.mxu0 0.0
    %367 = vmatmul.mubr.f32.gmra.mrb[0].mxu0 %v71
    %v368 = vpop.f32.mrb[0].mxu0
    %v369 = vadd.f32 %v120, %v368
    %v370 = vpop.f32.mrb[0].mxu0
    %371 = vmatprep.mubr.f32.mxu0 0.0
    %372 = vmatmul.mubr.f32.gmra.mrb[0].mxu0 %v72
    %v373 = vpop.f32.mrb[0].mxu0
    %v374 = vadd.f32 %v120, %v373
    %v375 = vpop.f32.mrb[0].mxu0
    %376 = vmatprep.mubr.f32.mxu0 0.0
    %377 = vmatmul.mubr.f32.gmra.mrb[0].mxu0 %v73
    %v378 = vpop.f32.mrb[0].mxu0
    %v379 = vadd.f32 %v120, %v378
    %v380 = vpop.f32.mrb[0].mxu0
    %381 = vmatprep.mubr.f32.mxu0 0.0
    %382 = vmatmul.mubr.f32.gmra.mrb[0].mxu0 %v74
    %v383 = vpop.f32.mrb[0].mxu0
    %v384 = vadd.f32 %v120, %v383
    %v385 = vpop.f32.mrb[0].mxu0
    %386 = vmatprep.mubr.f32.mxu0 0.0
    %387 = vmatmul.mubr.f32.gmra.mrb[0].mxu0 %v75
    %v388 = vpop.f32.mrb[0].mxu0
    %v389 = vadd.f32 %v120, %v388
    %v390 = vpop.f32.mrb[0].mxu0
    %391 = vmatprep.mubr.f32.mxu0 0.0
    %392 = vmatmul.mubr.f32.gmra.mrb[0].mxu0 %v76
    %v393 = vpop.f32.mrb[0].mxu0
    %v394 = vadd.f32 %v120, %v393
    %v395 = vpop.f32.mrb[0].mxu0
    %396 = vmatprep.mubr.f32.mxu0 0.0
    %397 = vmatmul.mubr.f32.gmra.mrb[0].mxu0 %v77
    %v398 = vpop.f32.mrb[0].mxu0
    %v399 = vadd.f32 %v120, %v398
    %v400 = vpop.f32.mrb[0].mxu0
    %401 = vmatprep.mubr.f32.mxu0 0.0
    %402 = vmatmul.mubr.f32.gmra.mrb[0].mxu0 %v78
    %v403 = vpop.f32.mrb[0].mxu0
    %v404 = vadd.f32 %v120, %v403
    %v405 = vpop.f32.mrb[0].mxu0
    %406 = vmatprep.mubr.f32.mxu0 0.0
    %407 = vmatmul.mubr.f32.gmra.mrb[0].mxu0 %v79
    %v408 = vpop.f32.mrb[0].mxu0
    %v409 = vadd.f32 %v120, %v408
    %v410 = vpop.f32.mrb[0].mxu0
    %411 = vmatprep.mubr.f32.mxu0 0.0
    %412 = vmatmul.mubr.f32.gmra.mrb[0].mxu0 %v80
    %v413 = vpop.f32.mrb[0].mxu0
    %v414 = vadd.f32 %v120, %v413
    %v415 = vpop.f32.mrb[0].mxu0
    %416 = vmatprep.mubr.f32.mxu0 0.0
    %417 = vmatmul.mubr.f32.gmra.mrb[0].mxu0 %v81
    %v418 = vpop.f32.mrb[0].mxu0
    %v419 = vadd.f32 %v120, %v418
    %v420 = vpop.f32.mrb[0].mxu0
    %421 = vmatprep.mubr.f32.mxu0 0.0
    %422 = vmatmul.mubr.f32.gmra.mrb[0].mxu0 %v82
    %v423 = vpop.f32.mrb[0].mxu0
    %v424 = vadd.f32 %v120, %v423
    %v425 = vpop.f32.mrb[0].mxu0
    %426 = vmatprep.mubr.f32.mxu0 0.0
    %427 = vmatmul.mubr.f32.gmra.mrb[0].mxu0 %v83
    %v428 = vpop.f32.mrb[0].mxu0
    %v429 = vadd.f32 %v120, %v428
    %v430 = vpop.f32.mrb[0].mxu0
    %431 = vmatprep.mubr.f32.mxu0 0.0
    %432 = vmatmul.mubr.f32.gmra.mrb[0].mxu0 %v84
    %v433 = vpop.f32.mrb[0].mxu0
    %v434 = vadd.f32 %v120, %v433
    %v435 = vpop.f32.mrb[0].mxu0
    %436 = vmatprep.mubr.f32.mxu0 0.0
    %437 = vmatmul.mubr.f32.gmra.mrb[0].mxu0 %v85
    %v438 = vpop.f32.mrb[0].mxu0
    %v439 = vadd.f32 %v120, %v438
    %v440 = vpop.f32.mrb[0].mxu0
    %441 = vmatprep.mubr.f32.mxu0 0.0
    %442 = vmatmul.mubr.f32.gmra.mrb[0].mxu0 %v86
    %v443 = vpop.f32.mrb[0].mxu0
    %v444 = vadd.f32 %v120, %v443
    %v445 = vpop.f32.mrb[0].mxu0
    %446 = vmatprep.mubr.f32.mxu0 0.0
    %447 = vmatmul.mubr.f32.gmra.mrb[0].mxu0 %v87
    %v448 = vpop.f32.mrb[0].mxu0
    %v449 = vadd.f32 %v120, %v448
    %v450 = vpop.f32.mrb[0].mxu0
    %451 = vmatprep.mubr.f32.mxu0 0.0
    %452 = vmatmul.mubr.f32.gmra.mrb[0].mxu0 %v88
    %v453 = vpop.f32.mrb[0].mxu0
    %v454 = vadd.f32 %v120, %v453
    %v455 = vpop.f32.mrb[0].mxu0
    %456 = vmatprep.mubr.f32.mxu0 0.0
    %457 = vmatmul.mubr.f32.gmra.mrb[0].mxu0 %v89
    %v458 = vpop.f32.mrb[0].mxu0
    %v459 = vadd.f32 %v120, %v458
    %v460 = vpop.f32.mrb[0].mxu0
    %461 = vmatprep.mubr.f32.mxu0 0.0
    %462 = vmatmul.mubr.f32.gmra.mrb[0].mxu0 %v90
    %v463 = vpop.f32.mrb[0].mxu0
    %v464 = vadd.f32 %v120, %v463
    %v465 = vpop.f32.mrb[0].mxu0
    %466 = vmatprep.mubr.f32.mxu0 0.0
    %467 = vmatmul.mubr.f32.gmra.mrb[0].mxu0 %v91
    %v468 = vpop.f32.mrb[0].mxu0
    %v469 = vadd.f32 %v120, %v468
    %v470 = vpop.f32.mrb[0].mxu0
    %471 = vmatprep.mubr.f32.mxu0 0.0
    %472 = vmatmul.mubr.f32.gmra.mrb[0].mxu0 %v92
    %v473 = vpop.f32.mrb[0].mxu0
    %v474 = vadd.f32 %v120, %v473
    %v475 = vpop.f32.mrb[0].mxu0
    %476 = vmatprep.mubr.f32.mxu0 0.0
    %477 = vmatmul.mubr.f32.gmra.mrb[0].mxu0 %v93
    %v478 = vpop.f32.mrb[0].mxu0
    %v479 = vadd.f32 %v120, %v478
    %v480 = vpop.f32.mrb[0].mxu0
    %481 = vmatprep.mubr.f32.mxu0 0.0
    %482 = vmatmul.mubr.f32.gmra.mrb[0].mxu0 %v94
    %v483 = vpop.f32.mrb[0].mxu0
    %v484 = vadd.f32 %v120, %v483
    %v485 = vpop.f32.mrb[0].mxu0
    %486 = vmatprep.mubr.f32.mxu0 0.0
    %487 = vmatmul.mubr.f32.gmra.mrb[0].mxu0 %v95
    %v488 = vpop.f32.mrb[0].mxu0
    %v489 = vadd.f32 %v120, %v488
    %v490 = vpop.f32.mrb[0].mxu0
    %491 = vmatprep.mubr.f32.mxu0 0.0
    %492 = vmatmul.mubr.f32.gmra.mrb[0].mxu0 %v96
    %v493 = vpop.f32.mrb[0].mxu0
    %v494 = vadd.f32 %v120, %v493
    %v495 = vpop.f32.mrb[0].mxu0
    %496 = vmatprep.mubr.f32.mxu0 0.0
    %497 = vmatmul.mubr.f32.gmra.mrb[0].mxu0 %v97
    %v498 = vpop.f32.mrb[0].mxu0
    %v499 = vadd.f32 %v120, %v498
    %v500 = vpop.f32.mrb[0].mxu0
    %501 = vmatprep.mubr.f32.mxu0 0.0
    %502 = vmatmul.mubr.f32.gmra.mrb[0].mxu0 %v98
    %v503 = vpop.f32.mrb[0].mxu0
    %v504 = vadd.f32 %v120, %v503
    %v505 = vpop.f32.mrb[0].mxu0
    %506 = vdwg.mxu0
    %v507 = vmax.f32 %v189, 0.0
    %v508 = vmax.f32 %v194, 0.0
    %v509 = vmax.f32 %v199, 0.0
    %v510 = vmax.f32 %v204, 0.0
    %v511 = vmax.f32 %v209, 0.0
    %v512 = vmax.f32 %v214, 0.0
    %v513 = vmax.f32 %v219, 0.0
    %v514 = vmax.f32 %v224, 0.0
    %v515 = vmax.f32 %v229, 0.0
    %v516 = vmax.f32 %v234, 0.0
    %v517 = vmax.f32 %v239, 0.0
    %v518 = vmax.f32 %v244, 0.0
    %v519 = vmax.f32 %v249, 0.0
    %v520 = vmax.f32 %v254, 0.0
    %v521 = vmax.f32 %v259, 0.0
    %v522 = vmax.f32 %v264, 0.0
    %v523 = vmax.f32 %v269, 0.0
    %v524 = vmax.f32 %v274, 0.0
    %v525 = vmax.f32 %v279, 0.0
    %v526 = vmax.f32 %v284, 0.0
    %v527 = vmax.f32 %v289, 0.0
    %v528 = vmax.f32 %v294, 0.0
    %v529 = vmax.f32 %v299, 0.0
    %v530 = vmax.f32 %v304, 0.0
    %v531 = vmax.f32 %v309, 0.0
    %v532 = vmax.f32 %v314, 0.0
    %v533 = vmax.f32 %v319, 0.0
    %v534 = vmax.f32 %v324, 0.0
    %v535 = vmax.f32 %v329, 0.0
    %v536 = vmax.f32 %v334, 0.0
    %v537 = vmax.f32 %v339, 0.0
    %v538 = vmax.f32 %v344, 0.0
    %v539 = vmax.f32 %v349, 0.0
    %v540 = vmax.f32 %v354, 0.0
    %v541 = vmax.f32 %v359, 0.0
    %v542 = vmax.f32 %v364, 0.0
    %v543 = vmax.f32 %v369, 0.0
    %v544 = vmax.f32 %v374, 0.0
    %v545 = vmax.f32 %v379, 0.0
    %v546 = vmax.f32 %v384, 0.0
    %v547 = vmax.f32 %v389, 0.0
    %v548 = vmax.f32 %v394, 0.0
    %v549 = vmax.f32 %v399, 0.0
    %v550 = vmax.f32 %v404, 0.0
    %v551 = vmax.f32 %v409, 0.0
    %v552 = vmax.f32 %v414, 0.0
    %v553 = vmax.f32 %v419, 0.0
    %v554 = vmax.f32 %v424, 0.0
    %v555 = vmax.f32 %v429, 0.0
    %v556 = vmax.f32 %v434, 0.0
    %v557 = vmax.f32 %v439, 0.0
    %v558 = vmax.f32 %v444, 0.0
    %v559 = vmax.f32 %v449, 0.0
    %v560 = vmax.f32 %v454, 0.0
    %v561 = vmax.f32 %v459, 0.0
    %v562 = vmax.f32 %v464, 0.0
    %v563 = vmax.f32 %v469, 0.0
    %v564 = vmax.f32 %v474, 0.0
    %v565 = vmax.f32 %v479, 0.0
    %v566 = vmax.f32 %v484, 0.0
    %v567 = vmax.f32 %v489, 0.0
    %v568 = vmax.f32 %v494, 0.0
    %v569 = vmax.f32 %v499, 0.0
    %v570 = vmax.f32 %v504, 0.0
    %v571 = vlaneseq
    %v572 = vshrl.u32 %v571, 7
    %v573 = vlaneseq
    %v574 = vand.u32 %v573, 127
    %v575 = vadd.s32 %v574, 128
    %v576 = vadd.s32 %v574, 256
    %v577 = vadd.s32 %v574, 384
    %v578 = vmul.u32 %v572, 256
    %vm579 = vcmp.ge.s32.totalorder %v574, %v578
    %vm580 = vcmp.ge.s32.totalorder %v575, %v578
    %vm581 = vcmp.ge.s32.totalorder %v576, %v578
    %vm582 = vcmp.ge.s32.totalorder %v577, %v578
    %v583 = vadd.s32 %v578, 256
    %vm584 = vcmp.lt.s32.totalorder %v574, %v583
    %vm585 = vcmp.lt.s32.totalorder %v575, %v583
    %vm586 = vcmp.lt.s32.totalorder %v576, %v583
    %vm587 = vcmp.lt.s32.totalorder %v577, %v583
    %vm588 = vmand %vm579, %vm584
    %vm589 = vmand %vm580, %vm585
    %vm590 = vmand %vm581, %vm586
    %vm591 = vmand %vm582, %vm587
    %v592 = vsel %vm588, 1, 0
    %v593 = vsel %vm589, 1, 0
    %v594 = vsel %vm590, 1, 0
    %v595 = vsel %vm591, 1, 0
    %v596 = vcvt.s32.f32 %v592
    %v597 = vcvt.s32.f32 %v593
    %v598 = vcvt.s32.f32 %v594
    %v599 = vcvt.s32.f32 %v595
    %600 = vmatprep.subr.mxu0 0.0
    %601 = vmatpush1.msra.mxu0 %v507
    %602 = vmatprep.subr.mxu0 0.0
    %603 = vmatpush1.msra.mxu0 %v508
    %604 = vmatprep.subr.mxu0 0.0
    %605 = vmatpush1.msra.mxu0 %v509
    %606 = vmatprep.subr.mxu0 0.0
    %607 = vmatpush1.msra.mxu0 %v510
    %608 = vmatprep.subr.mxu0 0.0
    %609 = vmatpush1.msra.mxu0 %v511
    %610 = vmatprep.subr.mxu0 0.0
    %611 = vmatpush1.msra.mxu0 %v512
    %612 = vmatprep.subr.mxu0 0.0
    %613 = vmatpush1.msra.mxu0 %v513
    %614 = vmatprep.subr.mxu0 0.0
    %615 = vmatpush1.msra.mxu0 %v514
    %616 = vmatprep.subr.mxu0 0.0
    %617 = vmatpush1.msra.mxu0 %v515
    %618 = vmatprep.subr.mxu0 0.0
    %619 = vmatpush1.msra.mxu0 %v516
    %620 = vmatprep.subr.mxu0 0.0
    %621 = vmatpush1.msra.mxu0 %v517
    %622 = vmatprep.subr.mxu0 0.0
    %623 = vmatpush1.msra.mxu0 %v518
    %624 = vmatprep.subr.mxu0 0.0
    %625 = vmatpush1.msra.mxu0 %v519
    %626 = vmatprep.subr.mxu0 0.0
    %627 = vmatpush1.msra.mxu0 %v520
    %628 = vmatprep.subr.mxu0 0.0
    %629 = vmatpush1.msra.mxu0 %v521
    %630 = vmatprep.subr.mxu0 0.0
    %631 = vmatpush1.msra.mxu0 %v522
    %632 = vmatprep.subr.mxu0 0.0
    %633 = vmatpush1.msra.mxu0 %v523
    %634 = vmatprep.subr.mxu0 0.0
    %635 = vmatpush1.msra.mxu0 %v524
    %636 = vmatprep.subr.mxu0 0.0
    %637 = vmatpush1.msra.mxu0 %v525
    %638 = vmatprep.subr.mxu0 0.0
    %639 = vmatpush1.msra.mxu0 %v526
    %640 = vmatprep.subr.mxu0 0.0
    %641 = vmatpush1.msra.mxu0 %v527
    %642 = vmatprep.subr.mxu0 0.0
    %643 = vmatpush1.msra.mxu0 %v528
    %644 = vmatprep.subr.mxu0 0.0
    %645 = vmatpush1.msra.mxu0 %v529
    %646 = vmatprep.subr.mxu0 0.0
    %647 = vmatpush1.msra.mxu0 %v530
    %648 = vmatprep.subr.mxu0 0.0
    %649 = vmatpush1.msra.mxu0 %v531
    %650 = vmatprep.subr.mxu0 0.0
    %651 = vmatpush1.msra.mxu0 %v532
    %652 = vmatprep.subr.mxu0 0.0
    %653 = vmatpush1.msra.mxu0 %v533
    %654 = vmatprep.subr.mxu0 0.0
    %655 = vmatpush1.msra.mxu0 %v534
    %656 = vmatprep.subr.mxu0 0.0
    %657 = vmatpush1.msra.mxu0 %v535
    %658 = vmatprep.subr.mxu0 0.0
    %659 = vmatpush1.msra.mxu0 %v536
    %660 = vmatprep.subr.mxu0 0.0
    %661 = vmatpush1.msra.mxu0 %v537
    %662 = vmatprep.subr.mxu0 0.0
    %663 = vmatpush1.msra.mxu0 %v538
    %664 = vmatprep.mubr.f32.mxu0 %v597
    %665 = vmatmul.mubr.f32.gmra.mrb[0].mxu0 %v596
    %v666 = vpop.f32.mrb[0].mxu0
    %v667 = vadd.f32 0.0, %v666
    %v668 = vpop.f32.mrb[0].mxu0
    %669 = vdwg.mxu0
    %670 = vmatprep.subr.mxu0 0.0
    %671 = vmatpush1.msra.mxu0 %v539
    %672 = vmatprep.subr.mxu0 0.0
    %673 = vmatpush1.msra.mxu0 %v540
    %674 = vmatprep.subr.mxu0 0.0
    %675 = vmatpush1.msra.mxu0 %v541
    %676 = vmatprep.subr.mxu0 0.0
    %677 = vmatpush1.msra.mxu0 %v542
    %678 = vmatprep.subr.mxu0 0.0
    %679 = vmatpush1.msra.mxu0 %v543
    %680 = vmatprep.subr.mxu0 0.0
    %681 = vmatpush1.msra.mxu0 %v544
    %682 = vmatprep.subr.mxu0 0.0
    %683 = vmatpush1.msra.mxu0 %v545
    %684 = vmatprep.subr.mxu0 0.0
    %685 = vmatpush1.msra.mxu0 %v546
    %686 = vmatprep.subr.mxu0 0.0
    %687 = vmatpush1.msra.mxu0 %v547
    %688 = vmatprep.subr.mxu0 0.0
    %689 = vmatpush1.msra.mxu0 %v548
    %690 = vmatprep.subr.mxu0 0.0
    %691 = vmatpush1.msra.mxu0 %v549
    %692 = vmatprep.subr.mxu0 0.0
    %693 = vmatpush1.msra.mxu0 %v550
    %694 = vmatprep.subr.mxu0 0.0
    %695 = vmatpush1.msra.mxu0 %v551
    %696 = vmatprep.subr.mxu0 0.0
    %697 = vmatpush1.msra.mxu0 %v552
    %698 = vmatprep.subr.mxu0 0.0
    %699 = vmatpush1.msra.mxu0 %v553
    %700 = vmatprep.subr.mxu0 0.0
    %701 = vmatpush1.msra.mxu0 %v554
    %702 = vmatprep.subr.mxu0 0.0
    %703 = vmatpush1.msra.mxu0 %v555
    %704 = vmatprep.subr.mxu0 0.0
    %705 = vmatpush1.msra.mxu0 %v556
    %706 = vmatprep.subr.mxu0 0.0
    %707 = vmatpush1.msra.mxu0 %v557
    %708 = vmatprep.subr.mxu0 0.0
    %709 = vmatpush1.msra.mxu0 %v558
    %710 = vmatprep.subr.mxu0 0.0
    %711 = vmatpush1.msra.mxu0 %v559
    %712 = vmatprep.subr.mxu0 0.0
    %713 = vmatpush1.msra.mxu0 %v560
    %714 = vmatprep.subr.mxu0 0.0
    %715 = vmatpush1.msra.mxu0 %v561
    %716 = vmatprep.subr.mxu0 0.0
    %717 = vmatpush1.msra.mxu0 %v562
    %718 = vmatprep.subr.mxu0 0.0
    %719 = vmatpush1.msra.mxu0 %v563
    %720 = vmatprep.subr.mxu0 0.0
    %721 = vmatpush1.msra.mxu0 %v564
    %722 = vmatprep.subr.mxu0 0.0
    %723 = vmatpush1.msra.mxu0 %v565
    %724 = vmatprep.subr.mxu0 0.0
    %725 = vmatpush1.msra.mxu0 %v566
    %726 = vmatprep.subr.mxu0 0.0
    %727 = vmatpush1.msra.mxu0 %v567
    %728 = vmatprep.subr.mxu0 0.0
    %729 = vmatpush1.msra.mxu0 %v568
    %730 = vmatprep.subr.mxu0 0.0
    %731 = vmatpush1.msra.mxu0 %v569
    %732 = vmatprep.subr.mxu0 0.0
    %733 = vmatpush1.msra.mxu0 %v570
    %734 = vmatprep.mubr.f32.mxu0 %v599
    %735 = vmatmul.mubr.f32.gmra.mrb[0].mxu0 %v598
    %v736 = vpop.f32.mrb[0].mxu0
    %v737 = vadd.f32 %v667, %v736
    %v738 = vpop.f32.mrb[0].mxu0
    %739 = vdwg.mxu0
    %v740 = vmul.f32 %v737, 0.00390625
    %v741 = vld [vmem:[%s3] sm:$0xff]
    %v742 = vld [vmem:[%s3 + $0x8] sm:$0xff]
    %v743 = vld [vmem:[%s3 + $0x10] sm:$0xff]
    %v744 = vld [vmem:[%s3 + $0x18] sm:$0xff]
    %v745 = vld [vmem:[%s3 + $0x20] sm:$0xff]
    %v746 = vld [vmem:[%s3 + $0x28] sm:$0xff]
    %v747 = vld [vmem:[%s3 + $0x30] sm:$0xff]
    %v748 = vld [vmem:[%s3 + $0x38] sm:$0xff]
    %v749 = vld [vmem:[%s3 + $0x40] sm:$0xff]
    %v750 = vld [vmem:[%s3 + $0x48] sm:$0xff]
    %v751 = vld [vmem:[%s3 + $0x50] sm:$0xff]
    %v752 = vld [vmem:[%s3 + $0x58] sm:$0xff]
    %v753 = vld [vmem:[%s3 + $0x60] sm:$0xff]
    %v754 = vld [vmem:[%s3 + $0x68] sm:$0xff]
    %v755 = vld [vmem:[%s3 + $0x70] sm:$0xff]
    %v756 = vld [vmem:[%s3 + $0x78] sm:$0xff]
    %757 = vmatprep.subr.mxu0 0.0
    %758 = vmatpush1.msra.mxu0 %v741
    %759 = vmatprep.subr.mxu0 0.0
    %760 = vmatpush1.msra.mxu0 %v742
    %761 = vmatprep.subr.mxu0 0.0
    %762 = vmatpush1.msra.mxu0 %v743
    %763 = vmatprep.subr.mxu0 0.0
    %764 = vmatpush1.msra.mxu0 %v744
    %765 = vmatprep.subr.mxu0 0.0
    %766 = vmatpush1.msra.mxu0 %v745
    %767 = vmatprep.subr.mxu0 0.0
    %768 = vmatpush1.msra.mxu0 %v746
    %769 = vmatprep.subr.mxu0 0.0
    %770 = vmatpush1.msra.mxu0 %v747
    %771 = vmatprep.subr.mxu0 0.0
    %772 = vmatpush1.msra.mxu0 %v748
    %773 = vmatprep.subr.mxu0 0.0
    %774 = vmatpush1.msra.mxu0 %v749
    %775 = vmatprep.subr.mxu0 0.0
    %776 = vmatpush1.msra.mxu0 %v750
    %777 = vmatprep.subr.mxu0 0.0
    %778 = vmatpush1.msra.mxu0 %v751
    %779 = vmatprep.subr.mxu0 0.0
    %780 = vmatpush1.msra.mxu0 %v752
    %781 = vmatprep.subr.mxu0 0.0
    %782 = vmatpush1.msra.mxu0 %v753
    %783 = vmatprep.subr.mxu0 0.0
    %784 = vmatpush1.msra.mxu0 %v754
    %785 = vmatprep.subr.mxu0 0.0
    %786 = vmatpush1.msra.mxu0 %v755
    %787 = vmatprep.subr.mxu0 0.0
    %788 = vmatpush1.msra.mxu0 %v756
    %789 = vmatprep.subr.mxu0 0.0
    %790 = vmatpush1.msra.mxu0 0.0
    %791 = vmatprep.subr.mxu0 0.0
    %792 = vmatpush1.msra.mxu0 0.0
    %793 = vmatprep.subr.mxu0 0.0
    %794 = vmatpush1.msra.mxu0 0.0
    %795 = vmatprep.subr.mxu0 0.0
    %796 = vmatpush1.msra.mxu0 0.0
    %797 = vmatprep.subr.mxu0 0.0
    %798 = vmatpush1.msra.mxu0 0.0
    %799 = vmatprep.subr.mxu0 0.0
    %800 = vmatpush1.msra.mxu0 0.0
    %801 = vmatprep.subr.mxu0 0.0
    %802 = vmatpush1.msra.mxu0 0.0
    %803 = vmatprep.subr.mxu0 0.0
    %804 = vmatpush1.msra.mxu0 0.0
    %805 = vmatprep.subr.mxu0 0.0
    %806 = vmatpush1.msra.mxu0 0.0
    %807 = vmatprep.subr.mxu0 0.0
    %808 = vmatpush1.msra.mxu0 0.0
    %809 = vmatprep.subr.mxu0 0.0
    %810 = vmatpush1.msra.mxu0 0.0
    %811 = vmatprep.subr.mxu0 0.0
    %812 = vmatpush1.msra.mxu0 0.0
    %813 = vmatprep.subr.mxu0 0.0
    %814 = vmatpush1.msra.mxu0 0.0
    %815 = vmatprep.subr.mxu0 0.0
    %816 = vmatpush1.msra.mxu0 0.0
    %817 = vmatprep.subr.mxu0 0.0
    %818 = vmatpush1.msra.mxu0 0.0
    %819 = vmatprep.subr.mxu0 0.0
    %820 = vmatpush1.msra.mxu0 0.0
    %821 = vmatprep.mubr.f32.mxu0 0.0
    %822 = vmatmul.mubr.f32.gmra.mrb[0].mxu0 %v740
    %v823 = vpop.f32.mrb[0].mxu0
    %v824 = vadd.f32 0.0, %v823
    %v825 = vpop.f32.mrb[0].mxu0
    %826 = vdwg.mxu0
    %v827 = vmax.f32 %v824, 0.0
    %v828 = vld [vmem:[%s4] sm:$0x3]
    %vm829 = vcmask 15360
    %v831 = vsel %vm829, %v827, 0
    %vm833 = vcmask 1041408
    %v835 = vsel %vm833, %v828, 0
    %837 = vmatprep.subr.mxu0 0.0
    %838 = vmatpush1.msra.mxu0 %v835
    %839 = vmatprep.subr.mxu0 0.0
    %840 = vmatpush1.msra.mxu0 0.0
    %841 = vmatprep.subr.mxu0 0.0
    %842 = vmatpush1.msra.mxu0 0.0
    %843 = vmatprep.subr.mxu0 0.0
    %844 = vmatpush1.msra.mxu0 0.0
    %845 = vmatprep.subr.mxu0 0.0
    %846 = vmatpush1.msra.mxu0 0.0
    %847 = vmatprep.subr.mxu0 0.0
    %848 = vmatpush1.msra.mxu0 0.0
    %849 = vmatprep.subr.mxu0 0.0
    %850 = vmatpush1.msra.mxu0 0.0
    %851 = vmatprep.subr.mxu0 0.0
    %852 = vmatpush1.msra.mxu0 0.0
    %853 = vmatprep.subr.mxu0 0.0
    %854 = vmatpush1.msra.mxu0 0.0
    %855 = vmatprep.subr.mxu0 0.0
    %856 = vmatpush1.msra.mxu0 0.0
    %857 = vmatprep.subr.mxu0 0.0
    %858 = vmatpush1.msra.mxu0 0.0
    %859 = vmatprep.subr.mxu0 0.0
    %860 = vmatpush1.msra.mxu0 0.0
    %861 = vmatprep.subr.mxu0 0.0
    %862 = vmatpush1.msra.mxu0 0.0
    %863 = vmatprep.subr.mxu0 0.0
    %864 = vmatpush1.msra.mxu0 0.0
    %865 = vmatprep.subr.mxu0 0.0
    %866 = vmatpush1.msra.mxu0 0.0
    %867 = vmatprep.subr.mxu0 0.0
    %868 = vmatpush1.msra.mxu0 0.0
    %869 = vmatprep.subr.mxu0 0.0
    %870 = vmatpush1.msra.mxu0 0.0
    %871 = vmatprep.subr.mxu0 0.0
    %872 = vmatpush1.msra.mxu0 0.0
    %873 = vmatprep.subr.mxu0 0.0
    %874 = vmatpush1.msra.mxu0 0.0
    %875 = vmatprep.subr.mxu0 0.0
    %876 = vmatpush1.msra.mxu0 0.0
    %877 = vmatprep.subr.mxu0 0.0
    %878 = vmatpush1.msra.mxu0 0.0
    %879 = vmatprep.subr.mxu0 0.0
    %880 = vmatpush1.msra.mxu0 0.0
    %881 = vmatprep.subr.mxu0 0.0
    %882 = vmatpush1.msra.mxu0 0.0
    %883 = vmatprep.subr.mxu0 0.0
    %884 = vmatpush1.msra.mxu0 0.0
    %885 = vmatprep.subr.mxu0 0.0
    %886 = vmatpush1.msra.mxu0 0.0
    %887 = vmatprep.subr.mxu0 0.0
    %888 = vmatpush1.msra.mxu0 0.0
    %889 = vmatprep.subr.mxu0 0.0
    %890 = vmatpush1.msra.mxu0 0.0
    %891 = vmatprep.subr.mxu0 0.0
    %892 = vmatpush1.msra.mxu0 0.0
    %893 = vmatprep.subr.mxu0 0.0
    %894 = vmatpush1.msra.mxu0 0.0
    %895 = vmatprep.subr.mxu0 0.0
    %896 = vmatpush1.msra.mxu0 0.0
    %897 = vmatprep.subr.mxu0 0.0
    %898 = vmatpush1.msra.mxu0 0.0
    %899 = vmatprep.subr.mxu0 0.0
    %900 = vmatpush1.msra.mxu0 0.0
    %901 = vmatprep.mubr.f32.mxu0 0.0
    %902 = vmatmul.mubr.f32.gmra.mrb[0].mxu0 %v831
    %v903 = vpop.f32.mrb[0].mxu0
    %v904 = vadd.f32 0.0, %v903
    %v905 = vpop.f32.mrb[0].mxu0
    %906 = vdwg.mxu0
    %v907 = vxor.u32 %v904, 2147483648
    %v908 = vmul.f32 %v907, 1.442695
    %v909 = vpow.pop %v908
    %v910 = vadd.f32 %v909, 1.0
    %v911 = vrcp.pop %v910
    %v912 = vmul.f32 1.0, %v911
    %v915 = vunpack.c.l.s4 1966171168
    %v916 = vunpack.c.0.s8 %v915
    %v917 = vlaneseq
    %v918 = vshrl.u32 %v917, 7
    %v919 = vsub.s32 %v916, %v918
    %v920 = vrot.slane %v912, %v919
    %v921 = vcombine.high %v920, %v920
    %v923 = vunpack.c.l.s4 1966171168
    %v924 = vunpack.c.0.s8 %v923
    %v925 = vlaneseq
    %v926 = vshrl.u32 %v925, 7
    %v927 = vsub.s32 %v924, %v926
    %v928 = vrot.slane %v920, %v927
    %v930 = vunpack.c.l.s4 1966171168
    %v931 = vunpack.c.0.s8 %v930
    %v932 = vlaneseq
    %v933 = vshrl.u32 %v932, 7
    %v934 = vsub.s32 %v931, %v933
    %v935 = vrot.slane %v921, %v934
    %v936 = vlaneseq
    %v937 = vshrl.u32 %v936, 7
    %v938 = vsub.s32 0, %v937
    %v939 = vrot.slane %v928, %v938
    %v940 = vlaneseq
    %v941 = vshrl.u32 %v940, 7
    %v942 = vsub.s32 0, %v941
    %v943 = vrot.slane %v935, %v942
    %v946 = vmul.f32 %v507, %v939
    %v947 = vmul.f32 %v508, %v939
    %v948 = vmul.f32 %v509, %v939
    %v949 = vmul.f32 %v510, %v939
    %v950 = vmul.f32 %v511, %v939
    %v951 = vmul.f32 %v512, %v939
    %v952 = vmul.f32 %v513, %v939
    %v953 = vmul.f32 %v514, %v939
    %v954 = vmul.f32 %v515, %v939
    %v955 = vmul.f32 %v516, %v939
    %v956 = vmul.f32 %v517, %v939
    %v957 = vmul.f32 %v518, %v939
    %v958 = vmul.f32 %v519, %v939
    %v959 = vmul.f32 %v520, %v939
    %v960 = vmul.f32 %v521, %v939
    %v961 = vmul.f32 %v522, %v939
    %v962 = vmul.f32 %v523, %v939
    %v963 = vmul.f32 %v524, %v939
    %v964 = vmul.f32 %v525, %v939
    %v965 = vmul.f32 %v526, %v939
    %v966 = vmul.f32 %v527, %v939
    %v967 = vmul.f32 %v528, %v939
    %v968 = vmul.f32 %v529, %v939
    %v969 = vmul.f32 %v530, %v939
    %v970 = vmul.f32 %v531, %v939
    %v971 = vmul.f32 %v532, %v939
    %v972 = vmul.f32 %v533, %v939
    %v973 = vmul.f32 %v534, %v939
    %v974 = vmul.f32 %v535, %v939
    %v975 = vmul.f32 %v536, %v939
    %v976 = vmul.f32 %v537, %v939
    %v977 = vmul.f32 %v538, %v939
    %v978 = vmul.f32 %v539, %v943
    %v979 = vmul.f32 %v540, %v943
    %v980 = vmul.f32 %v541, %v943
    %v981 = vmul.f32 %v542, %v943
    %v982 = vmul.f32 %v543, %v943
    %v983 = vmul.f32 %v544, %v943
    %v984 = vmul.f32 %v545, %v943
    %v985 = vmul.f32 %v546, %v943
    %v986 = vmul.f32 %v547, %v943
    %v987 = vmul.f32 %v548, %v943
    %v988 = vmul.f32 %v549, %v943
    %v989 = vmul.f32 %v550, %v943
    %v990 = vmul.f32 %v551, %v943
    %v991 = vmul.f32 %v552, %v943
    %v992 = vmul.f32 %v553, %v943
    %v993 = vmul.f32 %v554, %v943
    %v994 = vmul.f32 %v555, %v943
    %v995 = vmul.f32 %v556, %v943
    %v996 = vmul.f32 %v557, %v943
    %v997 = vmul.f32 %v558, %v943
    %v998 = vmul.f32 %v559, %v943
    %v999 = vmul.f32 %v560, %v943
    %v1000 = vmul.f32 %v561, %v943
    %v1001 = vmul.f32 %v562, %v943
    %v1002 = vmul.f32 %v563, %v943
    %v1003 = vmul.f32 %v564, %v943
    %v1004 = vmul.f32 %v565, %v943
    %v1005 = vmul.f32 %v566, %v943
    %v1006 = vmul.f32 %v567, %v943
    %v1007 = vmul.f32 %v568, %v943
    %v1008 = vmul.f32 %v569, %v943
    %v1009 = vmul.f32 %v570, %v943
    %1010 = vst [vmem:[#allocation5] sm:$0xff] %v946
    %1011 = vst [vmem:[#allocation5 + $0x8] sm:$0xff] %v947
    %1012 = vst [vmem:[#allocation5 + $0x10] sm:$0xff] %v948
    %1013 = vst [vmem:[#allocation5 + $0x18] sm:$0xff] %v949
    %1014 = vst [vmem:[#allocation5 + $0x20] sm:$0xff] %v950
    %1015 = vst [vmem:[#allocation5 + $0x28] sm:$0xff] %v951
    %1016 = vst [vmem:[#allocation5 + $0x30] sm:$0xff] %v952
    %1017 = vst [vmem:[#allocation5 + $0x38] sm:$0xff] %v953
    %1018 = vst [vmem:[#allocation5 + $0x40] sm:$0xff] %v954
    %1019 = vst [vmem:[#allocation5 + $0x48] sm:$0xff] %v955
    %1020 = vst [vmem:[#allocation5 + $0x50] sm:$0xff] %v956
    %1021 = vst [vmem:[#allocation5 + $0x58] sm:$0xff] %v957
    %1022 = vst [vmem:[#allocation5 + $0x60] sm:$0xff] %v958
    %1023 = vst [vmem:[#allocation5 + $0x68] sm:$0xff] %v959
    %1024 = vst [vmem:[#allocation5 + $0x70] sm:$0xff] %v960
    %1025 = vst [vmem:[#allocation5 + $0x78] sm:$0xff] %v961
    %1026 = vst [vmem:[#allocation5 + $0x80] sm:$0xff] %v962
    %1027 = vst [vmem:[#allocation5 + $0x88] sm:$0xff] %v963
    %1028 = vst [vmem:[#allocation5 + $0x90] sm:$0xff] %v964
    %1029 = vst [vmem:[#allocation5 + $0x98] sm:$0xff] %v965
    %1030 = vst [vmem:[#allocation5 + $0xa0] sm:$0xff] %v966
    %1031 = vst [vmem:[#allocation5 + $0xa8] sm:$0xff] %v967
    %1032 = vst [vmem:[#allocation5 + $0xb0] sm:$0xff] %v968
    %1033 = vst [vmem:[#allocation5 + $0xb8] sm:$0xff] %v969
    %1034 = vst [vmem:[#allocation5 + $0xc0] sm:$0xff] %v970
    %1035 = vst [vmem:[#allocation5 + $0xc8] sm:$0xff] %v971
    %1036 = vst [vmem:[#allocation5 + $0xd0] sm:$0xff] %v972
    %1037 = vst [vmem:[#allocation5 + $0xd8] sm:$0xff] %v973
    %1038 = vst [vmem:[#allocation5 + $0xe0] sm:$0xff] %v974
    %1039 = vst [vmem:[#allocation5 + $0xe8] sm:$0xff] %v975
    %1040 = vst [vmem:[#allocation5 + $0xf0] sm:$0xff] %v976
    %1041 = vst [vmem:[#allocation5 + $0xf8] sm:$0xff] %v977
    %1042 = vst [vmem:[#allocation5 + $0x100] sm:$0xff] %v978
    %1043 = vst [vmem:[#allocation5 + $0x108] sm:$0xff] %v979
    %1044 = vst [vmem:[#allocation5 + $0x110] sm:$0xff] %v980
    %1045 = vst [vmem:[#allocation5 + $0x118] sm:$0xff] %v981
    %1046 = vst [vmem:[#allocation5 + $0x120] sm:$0xff] %v982
    %1047 = vst [vmem:[#allocation5 + $0x128] sm:$0xff] %v983
    %1048 = vst [vmem:[#allocation5 + $0x130] sm:$0xff] %v984
    %1049 = vst [vmem:[#allocation5 + $0x138] sm:$0xff] %v985
    %1050 = vst [vmem:[#allocation5 + $0x140] sm:$0xff] %v986
    %1051 = vst [vmem:[#allocation5 + $0x148] sm:$0xff] %v987
    %1052 = vst [vmem:[#allocation5 + $0x150] sm:$0xff] %v988
    %1053 = vst [vmem:[#allocation5 + $0x158] sm:$0xff] %v989
    %1054 = vst [vmem:[#allocation5 + $0x160] sm:$0xff] %v990
    %1055 = vst [vmem:[#allocation5 + $0x168] sm:$0xff] %v991
    %1056 = vst [vmem:[#allocation5 + $0x170] sm:$0xff] %v992
    %1057 = vst [vmem:[#allocation5 + $0x178] sm:$0xff] %v993
    %1058 = vst [vmem:[#allocation5 + $0x180] sm:$0xff] %v994
    %1059 = vst [vmem:[#allocation5 + $0x188] sm:$0xff] %v995
    %1060 = vst [vmem:[#allocation5 + $0x190] sm:$0xff] %v996
    %1061 = vst [vmem:[#allocation5 + $0x198] sm:$0xff] %v997
    %1062 = vst [vmem:[#allocation5 + $0x1a0] sm:$0xff] %v998
    %1063 = vst [vmem:[#allocation5 + $0x1a8] sm:$0xff] %v999
    %1064 = vst [vmem:[#allocation5 + $0x1b0] sm:$0xff] %v1000
    %1065 = vst [vmem:[#allocation5 + $0x1b8] sm:$0xff] %v1001
    %1066 = vst [vmem:[#allocation5 + $0x1c0] sm:$0xff] %v1002
    %1067 = vst [vmem:[#allocation5 + $0x1c8] sm:$0xff] %v1003
    %1068 = vst [vmem:[#allocation5 + $0x1d0] sm:$0xff] %v1004
    %1069 = vst [vmem:[#allocation5 + $0x1d8] sm:$0xff] %v1005
    %1070 = vst [vmem:[#allocation5 + $0x1e0] sm:$0xff] %v1006
    %1071 = vst [vmem:[#allocation5 + $0x1e8] sm:$0xff] %v1007
    %1072 = vst [vmem:[#allocation5 + $0x1f0] sm:$0xff] %v1008
    %1073 = vst [vmem:[#allocation5 + $0x1f8] sm:$0xff] %v1009
    // Predicated region
    $region26: #{tpu_custom_call.1} parent=1 // pred_check
      _
    $region27: #{tpu_custom_call.1} parent=1 // pred_check_branch
      %1075 = sbr.rel (0) target = $region29
    $region28: #{tpu_custom_call.1} parent=1 // pred_region
      %s1077 = ssub.s32 8192, 8192
      %1078 = vsyncadd [#allocation4], %s1077
      %s1079 = sshll.u32 [#allocation5], 4
      %s1080 = int_to_ptr.vmem [resolvable:$true] %s1079
      %1085 = dma.vmem_to_hbm [thread:$0]  %s1080, 8192, %s5, [#allocation4], 128, 128, 8
    $region29: #{tpu_custom_call.1} parent=1 // pred_fallthru
      _
    // Predicated region
    $region30: #{tpu_custom_call.1} parent=1 // pred_check
      _
    $region31: #{tpu_custom_call.1} parent=1 // pred_check_branch
      %1087 = sbr.rel (0) target = $region33
    $region32: #{tpu_custom_call.1} parent=1 // pred_region
      %1088 = dma.done [#allocation4], 8192
    $region33: #{tpu_custom_call.1} parent=1 // pred_fallthru
      _
    %1089 = vsyncpa [#allocation3], 1
    %1090 = vsyncpa [#allocation4], 1

</llo_original>
